<compile_context>
chip_gen: v7x
topology: tpu7x:2x2x1
jax: 0.10.0
libtpu: 0.0.40
codegen_flags: <defaults>
</compile_context>

<pallas_src>
import jax
import jax.numpy as jnp
from jax.experimental import pallas as pl
from jax.experimental.pallas import tpu as pltpu

LEAKY_SLOPE = 0.01  # F.leaky_relu default negative_slope
LANE = 128


def _round_up(x, m):
    return ((x + m - 1) // m) * m


def _leaky_relu(x):
    return jnp.where(x >= 0, x, LEAKY_SLOPE * x)


def _mlp_kernel(*refs):
    """Fused MLP over one batch tile, all operands resident in VMEM.

    refs = (x_ref, w0, b0, w1, b1, ..., wL-1, bL-1, out_ref)
      x_ref : (TB, in_pad)  bf16
      w_i   : (in_pad_i, out_pad_i) bf16   (zero-padded)
      b_i   : (1, out_pad_i) f32           (zero-padded)
      out   : (TB, out_pad) f32            (lane-dense; real result in col 0)

    Leaky ReLU is applied after every layer except the last ('output') layer,
    matching the PyTorch forward. Dropout == identity (eval mode).
    """
    x_ref = refs[0]
    out_ref = refs[-1]
    wb_refs = refs[1:-1]
    n_layers = len(wb_refs) // 2

    h = x_ref[...]  # bf16
    for li in range(n_layers):
        w = wb_refs[2 * li][...]            # bf16
        b = wb_refs[2 * li + 1][...]        # f32, (1, out_pad)
        z = jnp.dot(h, w, preferred_element_type=jnp.float32) + b  # f32
        if li < n_layers - 1:
            h = _leaky_relu(z).astype(jnp.bfloat16)
        else:
            out_ref[...] = z.astype(out_ref.dtype)


def _pad_params_for_kernel(params):
    """Zero-pad every layer's (W, b) so feature dims are multiples of 128.

    W stored as (in, out); padding rows/cols with zeros keeps the math exact:
    padded activations stay exactly zero through leaky_relu and contribute
    nothing to the next layer.
    """
    padded = []
    for w, b in params:
        fi, fo = w.shape
        fip, fop = _round_up(fi, LANE), _round_up(fo, LANE)
        wp = jnp.zeros((fip, fop), jnp.bfloat16).at[:fi, :fo].set(
            w.astype(jnp.bfloat16))
        bp = jnp.zeros((1, fop), jnp.float32).at[:, :fo].set(
            b.astype(jnp.float32))
        padded.append((wp, bp))
    return padded


def ann_class_o_forward(x, params, *, block_batch=512):
    """Run the fused ANNclassO forward pass as a batch-tiled Pallas kernel.

    x:      (batch, inUnits) float32
    params: list of (W, b) with W shaped (in, out), b shaped (1, out)
    returns (batch, 1) float32
    """
    batch, in_units = x.shape
    out_units = params[-1][0].shape[1]  # == 1

    padded_params = _pad_params_for_kernel(params)
    in_pad = padded_params[0][0].shape[0]
    out_pad = padded_params[-1][0].shape[1]

    # Batch tile: as large as reasonable, multiple of 8 (sublane), and the
    # padded batch is a multiple of the tile so the grid divides evenly.
    tb = min(block_batch, _round_up(batch, 8))
    padded_batch = _round_up(batch, tb)

    xp = jnp.zeros((padded_batch, in_pad), jnp.bfloat16)
    xp = xp.at[:batch, :in_units].set(x.astype(jnp.bfloat16))

    flat_args = [xp]
    in_specs = [pl.BlockSpec((tb, in_pad), lambda i: (i, 0))]
    for wp, bp in padded_params:
        flat_args.append(wp)
        flat_args.append(bp)
        # Weights/biases: full-array blocks, constant index_map -> DMA'd once,
        # VMEM-resident across all batch tiles.
        in_specs.append(pl.BlockSpec(wp.shape, lambda i: (0, 0)))
        in_specs.append(pl.BlockSpec(bp.shape, lambda i: (0, 0)))

    out_specs = pl.BlockSpec((tb, out_pad), lambda i: (i, 0))

    out_padded = pl.pallas_call(
        _mlp_kernel,
        out_shape=jax.ShapeDtypeStruct((padded_batch, out_pad), jnp.float32),
        grid=(padded_batch // tb,),
        in_specs=in_specs,
        out_specs=out_specs,
        compiler_params=pltpu.CompilerParams(
            dimension_semantics=("parallel",)),
    )(*flat_args)

    return out_padded[:batch, :out_units]


def init_params(key, in_units, n_units, n_layers):
    """Deterministic init mirroring nn.Linear's U(-1/sqrt(fan_in), +1/sqrt(fan_in))."""
    dims = [(in_units, 200), (200, n_units)]
    dims += [(n_units, n_units)] * n_layers
    dims += [(n_units, 50), (50, 50), (50, 1)]

    params = []
    for (fan_in, fan_out) in dims:
        key, kw, kb = jax.random.split(key, 3)
        bound = 1.0 / jnp.sqrt(jnp.float32(fan_in))
        w = jax.random.uniform(kw, (fan_in, fan_out), jnp.float32, -bound, bound)
        b = jax.random.uniform(kb, (1, fan_out), jnp.float32, -bound, bound)
        params.append((w, b))
    return params


def reference_forward(x, params):
    """Plain-JAX f32 reference of the same forward (eval mode)."""
    h = x
    n = len(params)
    for li, (w, b) in enumerate(params):
        h = h @ w + b
        if li < n - 1:
            h = _leaky_relu(h)
    return h


if __name__ == "__main__":
    # Small shapes consistent with the module's forward:
    #   ANNclassO(selfdr=0.25, nUnits=64, nLayers=2, inUnits=32), batch = 8
    batch, in_units, n_units, n_layers = 8, 32, 64, 2

    key = jax.random.PRNGKey(0)
    key_x, key_p = jax.random.split(key)
    x = jax.random.normal(key_x, (batch, in_units), jnp.float32)
    params = init_params(key_p, in_units, n_units, n_layers)

    out = ann_class_o_forward(x, params)
    out = jax.block_until_ready(out)

    ref = reference_forward(x, params)
    assert out.shape == (batch, 1), out.shape
    # bf16 MXU operands -> loosened tolerance vs. the f32 reference.
    assert jnp.allclose(out, ref, atol=5e-2, rtol=5e-2), (
        f"max abs err = {jnp.max(jnp.abs(out - ref))}"
    )
    print("KERNEL_OK")
</pallas_src>

<mosaic_0001>
module attributes {stable_mosaic.version = 11 : i64} {
  func.func @_mlp_kernel(%arg0: i32, %arg1: memref<8x128xbf16, #tpu.memory_space<vmem>>, %arg2: memref<128x256xbf16, #tpu.memory_space<vmem>>, %arg3: memref<1x256xf32, #tpu.memory_space<vmem>>, %arg4: memref<256x128xbf16, #tpu.memory_space<vmem>>, %arg5: memref<1x128xf32, #tpu.memory_space<vmem>>, %arg6: memref<128x128xbf16, #tpu.memory_space<vmem>>, %arg7: memref<1x128xf32, #tpu.memory_space<vmem>>, %arg8: memref<128x128xbf16, #tpu.memory_space<vmem>>, %arg9: memref<1x128xf32, #tpu.memory_space<vmem>>, %arg10: memref<128x128xbf16, #tpu.memory_space<vmem>>, %arg11: memref<1x128xf32, #tpu.memory_space<vmem>>, %arg12: memref<128x128xbf16, #tpu.memory_space<vmem>>, %arg13: memref<1x128xf32, #tpu.memory_space<vmem>>, %arg14: memref<128x128xbf16, #tpu.memory_space<vmem>>, %arg15: memref<1x128xf32, #tpu.memory_space<vmem>>, %arg16: memref<8x128xf32, #tpu.memory_space<vmem>>) attributes {dimension_semantics = [#tpu.dimension_semantics<parallel>], iteration_bounds = array<i64: 1>, scalar_prefetch = 0 : i64, scratch_operands = 0 : i64, tpu.core_type = #tpu.core_type<tc>, window_params = [{transform_indices = @transform_0, window_bounds = array<i64: 8, 128>}, {pipeline_mode = #tpu.pipeline_mode<synchronous>, transform_indices = @transform_1, window_bounds = array<i64: 128, 256>}, {pipeline_mode = #tpu.pipeline_mode<synchronous>, transform_indices = @transform_2, window_bounds = array<i64: 1, 256>}, {pipeline_mode = #tpu.pipeline_mode<synchronous>, transform_indices = @transform_3, window_bounds = array<i64: 256, 128>}, {pipeline_mode = #tpu.pipeline_mode<synchronous>, transform_indices = @transform_4, window_bounds = array<i64: 1, 128>}, {pipeline_mode = #tpu.pipeline_mode<synchronous>, transform_indices = @transform_5, window_bounds = array<i64: 128, 128>}, {pipeline_mode = #tpu.pipeline_mode<synchronous>, transform_indices = @transform_6, window_bounds = array<i64: 1, 128>}, {pipeline_mode = #tpu.pipeline_mode<synchronous>, transform_indices = @transform_7, window_bounds = array<i64: 128, 128>}, {pipeline_mode = #tpu.pipeline_mode<synchronous>, transform_indices = @transform_8, window_bounds = array<i64: 1, 128>}, {pipeline_mode = #tpu.pipeline_mode<synchronous>, transform_indices = @transform_9, window_bounds = array<i64: 128, 128>}, {pipeline_mode = #tpu.pipeline_mode<synchronous>, transform_indices = @transform_10, window_bounds = array<i64: 1, 128>}, {pipeline_mode = #tpu.pipeline_mode<synchronous>, transform_indices = @transform_11, window_bounds = array<i64: 128, 128>}, {pipeline_mode = #tpu.pipeline_mode<synchronous>, transform_indices = @transform_12, window_bounds = array<i64: 1, 128>}, {pipeline_mode = #tpu.pipeline_mode<synchronous>, transform_indices = @transform_13, window_bounds = array<i64: 128, 128>}, {pipeline_mode = #tpu.pipeline_mode<synchronous>, transform_indices = @transform_14, window_bounds = array<i64: 1, 128>}, {transform_indices = @transform_15, window_bounds = array<i64: 8, 128>}]} {
    %c0 = arith.constant 0 : index
    %c0_0 = arith.constant 0 : index
    %0 = vector.load %arg1[%c0, %c0_0] : memref<8x128xbf16, #tpu.memory_space<vmem>>, vector<8x128xbf16>
    %c0_1 = arith.constant 0 : index
    %c0_2 = arith.constant 0 : index
    %1 = vector.load %arg2[%c0_1, %c0_2] : memref<128x256xbf16, #tpu.memory_space<vmem>>, vector<128x256xbf16>
    %c0_3 = arith.constant 0 : index
    %c0_4 = arith.constant 0 : index
    %2 = vector.load %arg3[%c0_3, %c0_4] : memref<1x256xf32, #tpu.memory_space<vmem>>, vector<1x256xf32>
    %cst = arith.constant dense<0.000000e+00> : vector<8x256xf32>
    %3 = tpu.matmul %0, %1, %cst {dimension_numbers = #tpu.dot_dimension_numbers<[1], [0], [0], [1], [0, 0, 1, 1], [], []>} : vector<8x128xbf16>, vector<128x256xbf16>, vector<8x256xf32> -> vector<8x256xf32>
    %4 = vector.broadcast %2 : vector<1x256xf32> to vector<8x256xf32>
    %5 = arith.addf %3, %4 : vector<8x256xf32>
    %cst_5 = arith.constant 0.000000e+00 : f32
    %6 = vector.broadcast %cst_5 : f32 to vector<8x256xf32>
    %7 = arith.cmpf oge, %5, %6 : vector<8x256xf32>
    %cst_6 = arith.constant 0.00999999977 : f32
    %8 = vector.broadcast %cst_6 : f32 to vector<8x256xf32>
    %9 = arith.mulf %8, %5 : vector<8x256xf32>
    %10 = arith.select %7, %5, %9 : vector<8x256xi1>, vector<8x256xf32>
    %11 = arith.truncf %10 : vector<8x256xf32> to vector<8x256xbf16>
    %c0_7 = arith.constant 0 : index
    %c0_8 = arith.constant 0 : index
    %12 = vector.load %arg4[%c0_7, %c0_8] : memref<256x128xbf16, #tpu.memory_space<vmem>>, vector<256x128xbf16>
    %c0_9 = arith.constant 0 : index
    %c0_10 = arith.constant 0 : index
    %13 = vector.load %arg5[%c0_9, %c0_10] : memref<1x128xf32, #tpu.memory_space<vmem>>, vector<1x128xf32>
    %cst_11 = arith.constant dense<0.000000e+00> : vector<8x128xf32>
    %14 = tpu.matmul %11, %12, %cst_11 {dimension_numbers = #tpu.dot_dimension_numbers<[1], [0], [0], [1], [0, 0, 1, 1], [], []>} : vector<8x256xbf16>, vector<256x128xbf16>, vector<8x128xf32> -> vector<8x128xf32>
    %15 = vector.broadcast %13 : vector<1x128xf32> to vector<8x128xf32>
    %16 = arith.addf %14, %15 : vector<8x128xf32>
    %cst_12 = arith.constant 0.000000e+00 : f32
    %17 = vector.broadcast %cst_12 : f32 to vector<8x128xf32>
    %18 = arith.cmpf oge, %16, %17 : vector<8x128xf32>
    %cst_13 = arith.constant 0.00999999977 : f32
    %19 = vector.broadcast %cst_13 : f32 to vector<8x128xf32>
    %20 = arith.mulf %19, %16 : vector<8x128xf32>
    %21 = arith.select %18, %16, %20 : vector<8x128xi1>, vector<8x128xf32>
    %22 = arith.truncf %21 : vector<8x128xf32> to vector<8x128xbf16>
    %c0_14 = arith.constant 0 : index
    %c0_15 = arith.constant 0 : index
    %23 = vector.load %arg6[%c0_14, %c0_15] : memref<128x128xbf16, #tpu.memory_space<vmem>>, vector<128x128xbf16>
    %c0_16 = arith.constant 0 : index
    %c0_17 = arith.constant 0 : index
    %24 = vector.load %arg7[%c0_16, %c0_17] : memref<1x128xf32, #tpu.memory_space<vmem>>, vector<1x128xf32>
    %cst_18 = arith.constant dense<0.000000e+00> : vector<8x128xf32>
    %25 = tpu.matmul %22, %23, %cst_18 {dimension_numbers = #tpu.dot_dimension_numbers<[1], [0], [0], [1], [0, 0, 1, 1], [], []>} : vector<8x128xbf16>, vector<128x128xbf16>, vector<8x128xf32> -> vector<8x128xf32>
    %26 = vector.broadcast %24 : vector<1x128xf32> to vector<8x128xf32>
    %27 = arith.addf %25, %26 : vector<8x128xf32>
    %cst_19 = arith.constant 0.000000e+00 : f32
    %28 = vector.broadcast %cst_19 : f32 to vector<8x128xf32>
    %29 = arith.cmpf oge, %27, %28 : vector<8x128xf32>
    %cst_20 = arith.constant 0.00999999977 : f32
    %30 = vector.broadcast %cst_20 : f32 to vector<8x128xf32>
    %31 = arith.mulf %30, %27 : vector<8x128xf32>
    %32 = arith.select %29, %27, %31 : vector<8x128xi1>, vector<8x128xf32>
    %33 = arith.truncf %32 : vector<8x128xf32> to vector<8x128xbf16>
    %c0_21 = arith.constant 0 : index
    %c0_22 = arith.constant 0 : index
    %34 = vector.load %arg8[%c0_21, %c0_22] : memref<128x128xbf16, #tpu.memory_space<vmem>>, vector<128x128xbf16>
    %c0_23 = arith.constant 0 : index
    %c0_24 = arith.constant 0 : index
    %35 = vector.load %arg9[%c0_23, %c0_24] : memref<1x128xf32, #tpu.memory_space<vmem>>, vector<1x128xf32>
    %cst_25 = arith.constant dense<0.000000e+00> : vector<8x128xf32>
    %36 = tpu.matmul %33, %34, %cst_25 {dimension_numbers = #tpu.dot_dimension_numbers<[1], [0], [0], [1], [0, 0, 1, 1], [], []>} : vector<8x128xbf16>, vector<128x128xbf16>, vector<8x128xf32> -> vector<8x128xf32>
    %37 = vector.broadcast %35 : vector<1x128xf32> to vector<8x128xf32>
    %38 = arith.addf %36, %37 : vector<8x128xf32>
    %cst_26 = arith.constant 0.000000e+00 : f32
    %39 = vector.broadcast %cst_26 : f32 to vector<8x128xf32>
    %40 = arith.cmpf oge, %38, %39 : vector<8x128xf32>
    %cst_27 = arith.constant 0.00999999977 : f32
    %41 = vector.broadcast %cst_27 : f32 to vector<8x128xf32>
    %42 = arith.mulf %41, %38 : vector<8x128xf32>
    %43 = arith.select %40, %38, %42 : vector<8x128xi1>, vector<8x128xf32>
    %44 = arith.truncf %43 : vector<8x128xf32> to vector<8x128xbf16>
    %c0_28 = arith.constant 0 : index
    %c0_29 = arith.constant 0 : index
    %45 = vector.load %arg10[%c0_28, %c0_29] : memref<128x128xbf16, #tpu.memory_space<vmem>>, vector<128x128xbf16>
    %c0_30 = arith.constant 0 : index
    %c0_31 = arith.constant 0 : index
    %46 = vector.load %arg11[%c0_30, %c0_31] : memref<1x128xf32, #tpu.memory_space<vmem>>, vector<1x128xf32>
    %cst_32 = arith.constant dense<0.000000e+00> : vector<8x128xf32>
    %47 = tpu.matmul %44, %45, %cst_32 {dimension_numbers = #tpu.dot_dimension_numbers<[1], [0], [0], [1], [0, 0, 1, 1], [], []>} : vector<8x128xbf16>, vector<128x128xbf16>, vector<8x128xf32> -> vector<8x128xf32>
    %48 = vector.broadcast %46 : vector<1x128xf32> to vector<8x128xf32>
    %49 = arith.addf %47, %48 : vector<8x128xf32>
    %cst_33 = arith.constant 0.000000e+00 : f32
    %50 = vector.broadcast %cst_33 : f32 to vector<8x128xf32>
    %51 = arith.cmpf oge, %49, %50 : vector<8x128xf32>
    %cst_34 = arith.constant 0.00999999977 : f32
    %52 = vector.broadcast %cst_34 : f32 to vector<8x128xf32>
    %53 = arith.mulf %52, %49 : vector<8x128xf32>
    %54 = arith.select %51, %49, %53 : vector<8x128xi1>, vector<8x128xf32>
    %55 = arith.truncf %54 : vector<8x128xf32> to vector<8x128xbf16>
    %c0_35 = arith.constant 0 : index
    %c0_36 = arith.constant 0 : index
    %56 = vector.load %arg12[%c0_35, %c0_36] : memref<128x128xbf16, #tpu.memory_space<vmem>>, vector<128x128xbf16>
    %c0_37 = arith.constant 0 : index
    %c0_38 = arith.constant 0 : index
    %57 = vector.load %arg13[%c0_37, %c0_38] : memref<1x128xf32, #tpu.memory_space<vmem>>, vector<1x128xf32>
    %cst_39 = arith.constant dense<0.000000e+00> : vector<8x128xf32>
    %58 = tpu.matmul %55, %56, %cst_39 {dimension_numbers = #tpu.dot_dimension_numbers<[1], [0], [0], [1], [0, 0, 1, 1], [], []>} : vector<8x128xbf16>, vector<128x128xbf16>, vector<8x128xf32> -> vector<8x128xf32>
    %59 = vector.broadcast %57 : vector<1x128xf32> to vector<8x128xf32>
    %60 = arith.addf %58, %59 : vector<8x128xf32>
    %cst_40 = arith.constant 0.000000e+00 : f32
    %61 = vector.broadcast %cst_40 : f32 to vector<8x128xf32>
    %62 = arith.cmpf oge, %60, %61 : vector<8x128xf32>
    %cst_41 = arith.constant 0.00999999977 : f32
    %63 = vector.broadcast %cst_41 : f32 to vector<8x128xf32>
    %64 = arith.mulf %63, %60 : vector<8x128xf32>
    %65 = arith.select %62, %60, %64 : vector<8x128xi1>, vector<8x128xf32>
    %66 = arith.truncf %65 : vector<8x128xf32> to vector<8x128xbf16>
    %c0_42 = arith.constant 0 : index
    %c0_43 = arith.constant 0 : index
    %67 = vector.load %arg14[%c0_42, %c0_43] : memref<128x128xbf16, #tpu.memory_space<vmem>>, vector<128x128xbf16>
    %c0_44 = arith.constant 0 : index
    %c0_45 = arith.constant 0 : index
    %68 = vector.load %arg15[%c0_44, %c0_45] : memref<1x128xf32, #tpu.memory_space<vmem>>, vector<1x128xf32>
    %cst_46 = arith.constant dense<0.000000e+00> : vector<8x128xf32>
    %69 = tpu.matmul %66, %67, %cst_46 {dimension_numbers = #tpu.dot_dimension_numbers<[1], [0], [0], [1], [0, 0, 1, 1], [], []>} : vector<8x128xbf16>, vector<128x128xbf16>, vector<8x128xf32> -> vector<8x128xf32>
    %70 = vector.broadcast %68 : vector<1x128xf32> to vector<8x128xf32>
    %71 = arith.addf %69, %70 : vector<8x128xf32>
    %c0_47 = arith.constant 0 : index
    %c0_48 = arith.constant 0 : index
    %72 = vector.load %arg16[%c0_47, %c0_48] : memref<8x128xf32, #tpu.memory_space<vmem>>, vector<8x128xf32>
    tpu.vector_store %arg16[%c0_47, %c0_48], %71 {strides = array<i32>} : memref<8x128xf32, #tpu.memory_space<vmem>>, vector<8x128xf32>,
    return
  }
  func.func @transform_0(%arg0: i32) -> (i32, i32) {
    %c0_i32 = arith.constant 0 : i32
    %c0_i32_0 = arith.constant 0 : i32
    return %arg0, %c0_i32 : i32, i32
  }
  func.func @transform_1(%arg0: i32) -> (i32, i32) {
    %c0_i32 = arith.constant 0 : i32
    %c0_i32_0 = arith.constant 0 : i32
    %c0_i32_1 = arith.constant 0 : i32
    return %c0_i32, %c0_i32_0 : i32, i32
  }
  func.func @transform_2(%arg0: i32) -> (i32, i32) {
    %c0_i32 = arith.constant 0 : i32
    %c0_i32_0 = arith.constant 0 : i32
    %c0_i32_1 = arith.constant 0 : i32
    return %c0_i32, %c0_i32_0 : i32, i32
  }
  func.func @transform_3(%arg0: i32) -> (i32, i32) {
    %c0_i32 = arith.constant 0 : i32
    %c0_i32_0 = arith.constant 0 : i32
    %c0_i32_1 = arith.constant 0 : i32
    return %c0_i32, %c0_i32_0 : i32, i32
  }
  func.func @transform_4(%arg0: i32) -> (i32, i32) {
    %c0_i32 = arith.constant 0 : i32
    %c0_i32_0 = arith.constant 0 : i32
    %c0_i32_1 = arith.constant 0 : i32
    return %c0_i32, %c0_i32_0 : i32, i32
  }
  func.func @transform_5(%arg0: i32) -> (i32, i32) {
    %c0_i32 = arith.constant 0 : i32
    %c0_i32_0 = arith.constant 0 : i32
    %c0_i32_1 = arith.constant 0 : i32
    return %c0_i32, %c0_i32_0 : i32, i32
  }
  func.func @transform_6(%arg0: i32) -> (i32, i32) {
    %c0_i32 = arith.constant 0 : i32
    %c0_i32_0 = arith.constant 0 : i32
    %c0_i32_1 = arith.constant 0 : i32
    return %c0_i32, %c0_i32_0 : i32, i32
  }
  func.func @transform_7(%arg0: i32) -> (i32, i32) {
    %c0_i32 = arith.constant 0 : i32
    %c0_i32_0 = arith.constant 0 : i32
    %c0_i32_1 = arith.constant 0 : i32
    return %c0_i32, %c0_i32_0 : i32, i32
  }
  func.func @transform_8(%arg0: i32) -> (i32, i32) {
    %c0_i32 = arith.constant 0 : i32
    %c0_i32_0 = arith.constant 0 : i32
    %c0_i32_1 = arith.constant 0 : i32
    return %c0_i32, %c0_i32_0 : i32, i32
  }
  func.func @transform_9(%arg0: i32) -> (i32, i32) {
    %c0_i32 = arith.constant 0 : i32
    %c0_i32_0 = arith.constant 0 : i32
    %c0_i32_1 = arith.constant 0 : i32
    return %c0_i32, %c0_i32_0 : i32, i32
  }
  func.func @transform_10(%arg0: i32) -> (i32, i32) {
    %c0_i32 = arith.constant 0 : i32
    %c0_i32_0 = arith.constant 0 : i32
    %c0_i32_1 = arith.constant 0 : i32
    return %c0_i32, %c0_i32_0 : i32, i32
  }
  func.func @transform_11(%arg0: i32) -> (i32, i32) {
    %c0_i32 = arith.constant 0 : i32
    %c0_i32_0 = arith.constant 0 : i32
    %c0_i32_1 = arith.constant 0 : i32
    return %c0_i32, %c0_i32_0 : i32, i32
  }
  func.func @transform_12(%arg0: i32) -> (i32, i32) {
    %c0_i32 = arith.constant 0 : i32
    %c0_i32_0 = arith.constant 0 : i32
    %c0_i32_1 = arith.constant 0 : i32
    return %c0_i32, %c0_i32_0 : i32, i32
  }
  func.func @transform_13(%arg0: i32) -> (i32, i32) {
    %c0_i32 = arith.constant 0 : i32
    %c0_i32_0 = arith.constant 0 : i32
    %c0_i32_1 = arith.constant 0 : i32
    return %c0_i32, %c0_i32_0 : i32, i32
  }
  func.func @transform_14(%arg0: i32) -> (i32, i32) {
    %c0_i32 = arith.constant 0 : i32
    %c0_i32_0 = arith.constant 0 : i32
    %c0_i32_1 = arith.constant 0 : i32
    return %c0_i32, %c0_i32_0 : i32, i32
  }
  func.func @transform_15(%arg0: i32) -> (i32, i32) {
    %c0_i32 = arith.constant 0 : i32
    %c0_i32_0 = arith.constant 0 : i32
    return %arg0, %c0_i32 : i32, i32
  }
}

</mosaic_0001>

<llo_original>
// kernel: tpu_custom_call.1
$region0: #{tpu_custom_call.1}
  #allocation0 [shape = 'u32[]', space=smem, size = 0x4, offset = 0x4, fixed_abs, tag = 'smem constant byte address 0x4 - core index']
  #allocation1 [shape = 'u32[144,128]{1,0:T(1,128)}', space=vmem, size = 0x12000, scoped, tag = 'internal scratch']
  %s0 = inlined_call_operand.hbm [shape: bf16[8,128], index: 0, kind: input, shape index: {}]
  %s1 = inlined_call_operand.hbm [shape: bf16[128,256], index: 1, kind: input, shape index: {}]
  %s2 = inlined_call_operand.vmem [shape: f32[1,256], index: 2, kind: input, shape index: {}]
  %s3 = inlined_call_operand.hbm [shape: bf16[256,128], index: 3, kind: input, shape index: {}]
  %s4 = inlined_call_operand.vmem [shape: f32[1,128], index: 4, kind: input, shape index: {}]
  %s5 = inlined_call_operand.hbm [shape: bf16[128,128], index: 5, kind: input, shape index: {}]
  %s6 = inlined_call_operand.vmem [shape: f32[1,128], index: 6, kind: input, shape index: {}]
  %s7 = inlined_call_operand.hbm [shape: bf16[128,128], index: 7, kind: input, shape index: {}]
  %s8 = inlined_call_operand.vmem [shape: f32[1,128], index: 8, kind: input, shape index: {}]
  %s9 = inlined_call_operand.hbm [shape: bf16[128,128], index: 9, kind: input, shape index: {}]
  %s10 = inlined_call_operand.vmem [shape: f32[1,128], index: 10, kind: input, shape index: {}]
  %s11 = inlined_call_operand.hbm [shape: bf16[128,128], index: 11, kind: input, shape index: {}]
  %s12 = inlined_call_operand.vmem [shape: f32[1,128], index: 12, kind: input, shape index: {}]
  %s13 = inlined_call_operand.hbm [shape: bf16[128,128], index: 13, kind: input, shape index: {}]
  %s14 = inlined_call_operand.vmem [shape: f32[1,128], index: 14, kind: input, shape index: {}]
  %s15 = inlined_call_operand.hbm [shape: f32[8,128], index: 15, kind: output, shape index: {}]
  %s16 = sld [smem:[#allocation0]]
  $region102: #{tpu_custom_call.1} parent=0
    _
  %s18 = ssub.s32 1, %s16
  %s19 = scalar_select 0, %s18, %s16
  $region1: #{tpu_custom_call.1} parent=0
    #allocation2 [shape = 'u8[2048]{0}', space=vmem, size = 0x800, scoped, tag = 'input window, operand 0, single buffered']
    #allocation3 [shape = 's32[1]{0}', space=sflag, size = 0x4, scoped, tag = 'scoped memory for tpu_custom_call.1']
    #allocation4 [shape = 's32[1]{0}', space=sflag, size = 0x4, scoped, tag = 'scoped memory for tpu_custom_call.1']
    #allocation5 [shape = 'u8[65536]{0}', space=vmem, size = 0x10000, scoped, tag = 'input window, operand 1, single buffered']
    #allocation6 [shape = 's32[1]{0}', space=sflag, size = 0x4, scoped, tag = 'scoped memory for tpu_custom_call.1']
    #allocation7 [shape = 'u8[65536]{0}', space=vmem, size = 0x10000, scoped, tag = 'input window, operand 3, single buffered']
    #allocation8 [shape = 'u8[32768]{0}', space=vmem, size = 0x8000, scoped, tag = 'input window, operand 5, single buffered']
    #allocation9 [shape = 's32[1]{0}', space=sflag, size = 0x4, scoped, tag = 'scoped memory for tpu_custom_call.1']
    #allocation10 [shape = 'u8[32768]{0}', space=vmem, size = 0x8000, scoped, tag = 'input window, operand 7, single buffered']
    #allocation11 [shape = 'u8[32768]{0}', space=vmem, size = 0x8000, scoped, tag = 'input window, operand 9, single buffered']
    #allocation12 [shape = 's32[1]{0}', space=sflag, size = 0x4, scoped, tag = 'scoped memory for tpu_custom_call.1']
    #allocation13 [shape = 'u8[32768]{0}', space=vmem, size = 0x8000, scoped, tag = 'input window, operand 11, single buffered']
    #allocation14 [shape = 'u8[32768]{0}', space=vmem, size = 0x8000, scoped, tag = 'input window, operand 13, single buffered']
    #allocation15 [shape = 's32[1]{0}', space=sflag, size = 0x4, scoped, tag = 'scoped memory for tpu_custom_call.1']
    #allocation16 [shape = 'u8[4096]{0}', space=vmem, size = 0x1000, scoped, tag = 'output window, operand 0, single buffered']
    %20 = vsyncpa [#allocation3], 0
    %21 = vsyncpa [#allocation6], 0
    %22 = vsyncpa [#allocation9], 0
    %23 = vsyncpa [#allocation12], 0
    %24 = vsyncpa [#allocation15], 0
    %25 = vsyncpa [#allocation4], 0
    // Predicated region
    $region2: #{tpu_custom_call.1} parent=1 // pred_check
      _
    $region3: #{tpu_custom_call.1} parent=1 // pred_check_branch
      %27 = sbr.rel (0) target = $region5
    $region4: #{tpu_custom_call.1} parent=1 // pred_region
      %s29 = ssub.s32 64, 64
      %30 = vsyncadd [#allocation3], %s29
      %s32 = sshll.u32 [#allocation2], 4
      %s33 = int_to_ptr.vmem [resolvable:$true] %s32
      %35 = dma.hbm_to_vmem [thread:$0]  %s0, 64, %s33, [#allocation3]
    $region5: #{tpu_custom_call.1} parent=1 // pred_fallthru
      _
    // Predicated region
    $region6: #{tpu_custom_call.1} parent=1 // pred_check
      _
    $region7: #{tpu_custom_call.1} parent=1 // pred_check_branch
      %37 = sbr.rel (0) target = $region9
    $region8: #{tpu_custom_call.1} parent=1 // pred_region
      %s39 = ssub.s32 2048, 2048
      %40 = vsyncadd [#allocation6], %s39
      %s41 = sshll.u32 [#allocation5], 4
      %s42 = int_to_ptr.vmem [resolvable:$true] %s41
      %47 = dma.hbm_to_vmem [thread:$0]  %s1, 2048, %s42, [#allocation6], 128, 128, 8
    $region9: #{tpu_custom_call.1} parent=1 // pred_fallthru
      _
    // Predicated region
    $region10: #{tpu_custom_call.1} parent=1 // pred_check
      _
    $region11: #{tpu_custom_call.1} parent=1 // pred_check_branch
      %49 = sbr.rel (0) target = $region13
    $region12: #{tpu_custom_call.1} parent=1 // pred_region
      _
    $region13: #{tpu_custom_call.1} parent=1 // pred_fallthru
      _
    // Predicated region
    $region14: #{tpu_custom_call.1} parent=1 // pred_check
      _
    $region15: #{tpu_custom_call.1} parent=1 // pred_check_branch
      %51 = sbr.rel (0) target = $region17
    $region16: #{tpu_custom_call.1} parent=1 // pred_region
      %s53 = ssub.s32 2048, 2048
      %54 = vsyncadd [#allocation6], %s53
      %s55 = sshll.u32 [#allocation7], 4
      %s56 = int_to_ptr.vmem [resolvable:$true] %s55
      %61 = dma.hbm_to_vmem [thread:$0]  %s3, 2048, %s56, [#allocation6], 64, 64, 4
    $region17: #{tpu_custom_call.1} parent=1 // pred_fallthru
      _
    // Predicated region
    $region18: #{tpu_custom_call.1} parent=1 // pred_check
      _
    $region19: #{tpu_custom_call.1} parent=1 // pred_check_branch
      %63 = sbr.rel (0) target = $region21
    $region20: #{tpu_custom_call.1} parent=1 // pred_region
      _
    $region21: #{tpu_custom_call.1} parent=1 // pred_fallthru
      _
    // Predicated region
    $region22: #{tpu_custom_call.1} parent=1 // pred_check
      _
    $region23: #{tpu_custom_call.1} parent=1 // pred_check_branch
      %65 = sbr.rel (0) target = $region25
    $region24: #{tpu_custom_call.1} parent=1 // pred_region
      %s67 = ssub.s32 1024, 1024
      %68 = vsyncadd [#allocation9], %s67
      %s69 = sshll.u32 [#allocation8], 4
      %s70 = int_to_ptr.vmem [resolvable:$true] %s69
      %75 = dma.hbm_to_vmem [thread:$0]  %s5, 1024, %s70, [#allocation9], 64, 64, 4
    $region25: #{tpu_custom_call.1} parent=1 // pred_fallthru
      _
    // Predicated region
    $region26: #{tpu_custom_call.1} parent=1 // pred_check
      _
    $region27: #{tpu_custom_call.1} parent=1 // pred_check_branch
      %77 = sbr.rel (0) target = $region29
    $region28: #{tpu_custom_call.1} parent=1 // pred_region
      _
    $region29: #{tpu_custom_call.1} parent=1 // pred_fallthru
      _
    // Predicated region
    $region30: #{tpu_custom_call.1} parent=1 // pred_check
      _
    $region31: #{tpu_custom_call.1} parent=1 // pred_check_branch
      %79 = sbr.rel (0) target = $region33
    $region32: #{tpu_custom_call.1} parent=1 // pred_region
      %s81 = ssub.s32 1024, 1024
      %82 = vsyncadd [#allocation9], %s81
      %s83 = sshll.u32 [#allocation10], 4
      %s84 = int_to_ptr.vmem [resolvable:$true] %s83
      %89 = dma.hbm_to_vmem [thread:$0]  %s7, 1024, %s84, [#allocation9], 64, 64, 4
    $region33: #{tpu_custom_call.1} parent=1 // pred_fallthru
      _
    // Predicated region
    $region34: #{tpu_custom_call.1} parent=1 // pred_check
      _
    $region35: #{tpu_custom_call.1} parent=1 // pred_check_branch
      %91 = sbr.rel (0) target = $region37
    $region36: #{tpu_custom_call.1} parent=1 // pred_region
      _
    $region37: #{tpu_custom_call.1} parent=1 // pred_fallthru
      _
    // Predicated region
    $region38: #{tpu_custom_call.1} parent=1 // pred_check
      _
    $region39: #{tpu_custom_call.1} parent=1 // pred_check_branch
      %93 = sbr.rel (0) target = $region41
    $region40: #{tpu_custom_call.1} parent=1 // pred_region
      %s95 = ssub.s32 1024, 1024
      %96 = vsyncadd [#allocation12], %s95
      %s97 = sshll.u32 [#allocation11], 4
      %s98 = int_to_ptr.vmem [resolvable:$true] %s97
      %103 = dma.hbm_to_vmem [thread:$0]  %s9, 1024, %s98, [#allocation12], 64, 64, 4
    $region41: #{tpu_custom_call.1} parent=1 // pred_fallthru
      _
    // Predicated region
    $region42: #{tpu_custom_call.1} parent=1 // pred_check
      _
    $region43: #{tpu_custom_call.1} parent=1 // pred_check_branch
      %105 = sbr.rel (0) target = $region45
    $region44: #{tpu_custom_call.1} parent=1 // pred_region
      _
    $region45: #{tpu_custom_call.1} parent=1 // pred_fallthru
      _
    // Predicated region
    $region46: #{tpu_custom_call.1} parent=1 // pred_check
      _
    $region47: #{tpu_custom_call.1} parent=1 // pred_check_branch
      %107 = sbr.rel (0) target = $region49
    $region48: #{tpu_custom_call.1} parent=1 // pred_region
      %s109 = ssub.s32 1024, 1024
      %110 = vsyncadd [#allocation12], %s109
      %s111 = sshll.u32 [#allocation13], 4
      %s112 = int_to_ptr.vmem [resolvable:$true] %s111
      %117 = dma.hbm_to_vmem [thread:$0]  %s11, 1024, %s112, [#allocation12], 64, 64, 4
    $region49: #{tpu_custom_call.1} parent=1 // pred_fallthru
      _
    // Predicated region
    $region50: #{tpu_custom_call.1} parent=1 // pred_check
      _
    $region51: #{tpu_custom_call.1} parent=1 // pred_check_branch
      %119 = sbr.rel (0) target = $region53
    $region52: #{tpu_custom_call.1} parent=1 // pred_region
      _
    $region53: #{tpu_custom_call.1} parent=1 // pred_fallthru
      _
    // Predicated region
    $region54: #{tpu_custom_call.1} parent=1 // pred_check
      _
    $region55: #{tpu_custom_call.1} parent=1 // pred_check_branch
      %121 = sbr.rel (0) target = $region57
    $region56: #{tpu_custom_call.1} parent=1 // pred_region
      %s123 = ssub.s32 1024, 1024
      %124 = vsyncadd [#allocation15], %s123
      %s125 = sshll.u32 [#allocation14], 4
      %s126 = int_to_ptr.vmem [resolvable:$true] %s125
      %131 = dma.hbm_to_vmem [thread:$0]  %s13, 1024, %s126, [#allocation15], 64, 64, 4
    $region57: #{tpu_custom_call.1} parent=1 // pred_fallthru
      _
    // Predicated region
    $region58: #{tpu_custom_call.1} parent=1 // pred_check
      _
    $region59: #{tpu_custom_call.1} parent=1 // pred_check_branch
      %133 = sbr.rel (0) target = $region61
    $region60: #{tpu_custom_call.1} parent=1 // pred_region
      _
    $region61: #{tpu_custom_call.1} parent=1 // pred_fallthru
      _
    // Predicated region
    $region62: #{tpu_custom_call.1} parent=1 // pred_check
      _
    $region63: #{tpu_custom_call.1} parent=1 // pred_check_branch
      %135 = sbr.rel (0) target = $region65
    $region64: #{tpu_custom_call.1} parent=1 // pred_region
      %136 = dma.done [#allocation3], 64
    $region65: #{tpu_custom_call.1} parent=1 // pred_fallthru
      _
    // Predicated region
    $region66: #{tpu_custom_call.1} parent=1 // pred_check
      _
    $region67: #{tpu_custom_call.1} parent=1 // pred_check_branch
      %138 = sbr.rel (0) target = $region69
    $region68: #{tpu_custom_call.1} parent=1 // pred_region
      %139 = dma.done [#allocation6], 2048
    $region69: #{tpu_custom_call.1} parent=1 // pred_fallthru
      _
    // Predicated region
    $region70: #{tpu_custom_call.1} parent=1 // pred_check
      _
    $region71: #{tpu_custom_call.1} parent=1 // pred_check_branch
      %141 = sbr.rel (0) target = $region73
    $region72: #{tpu_custom_call.1} parent=1 // pred_region
      %142 = dma.done [#allocation6], 2048
    $region73: #{tpu_custom_call.1} parent=1 // pred_fallthru
      _
    // Predicated region
    $region74: #{tpu_custom_call.1} parent=1 // pred_check
      _
    $region75: #{tpu_custom_call.1} parent=1 // pred_check_branch
      %144 = sbr.rel (0) target = $region77
    $region76: #{tpu_custom_call.1} parent=1 // pred_region
      %145 = dma.done [#allocation9], 1024
    $region77: #{tpu_custom_call.1} parent=1 // pred_fallthru
      _
    // Predicated region
    $region78: #{tpu_custom_call.1} parent=1 // pred_check
      _
    $region79: #{tpu_custom_call.1} parent=1 // pred_check_branch
      %147 = sbr.rel (0) target = $region81
    $region80: #{tpu_custom_call.1} parent=1 // pred_region
      %148 = dma.done [#allocation9], 1024
    $region81: #{tpu_custom_call.1} parent=1 // pred_fallthru
      _
    // Predicated region
    $region82: #{tpu_custom_call.1} parent=1 // pred_check
      _
    $region83: #{tpu_custom_call.1} parent=1 // pred_check_branch
      %150 = sbr.rel (0) target = $region85
    $region84: #{tpu_custom_call.1} parent=1 // pred_region
      %151 = dma.done [#allocation12], 1024
    $region85: #{tpu_custom_call.1} parent=1 // pred_fallthru
      _
    // Predicated region
    $region86: #{tpu_custom_call.1} parent=1 // pred_check
      _
    $region87: #{tpu_custom_call.1} parent=1 // pred_check_branch
      %153 = sbr.rel (0) target = $region89
    $region88: #{tpu_custom_call.1} parent=1 // pred_region
      %154 = dma.done [#allocation12], 1024
    $region89: #{tpu_custom_call.1} parent=1 // pred_fallthru
      _
    // Predicated region
    $region90: #{tpu_custom_call.1} parent=1 // pred_check
      _
    $region91: #{tpu_custom_call.1} parent=1 // pred_check_branch
      %156 = sbr.rel (0) target = $region93
    $region92: #{tpu_custom_call.1} parent=1 // pred_region
      %157 = dma.done [#allocation15], 1024
    $region93: #{tpu_custom_call.1} parent=1 // pred_fallthru
      _
    %v159 = vld [vmem:[#allocation2] sm:$0xf]
    %v160 = vld [vmem:[#allocation5] sm:$0xff]
    %v161 = vld [vmem:[#allocation5 + $0x8] sm:$0xff]
    %v162 = vld [vmem:[#allocation5 + $0x10] sm:$0xff]
    %v163 = vld [vmem:[#allocation5 + $0x18] sm:$0xff]
    %v164 = vld [vmem:[#allocation5 + $0x20] sm:$0xff]
    %v165 = vld [vmem:[#allocation5 + $0x28] sm:$0xff]
    %v166 = vld [vmem:[#allocation5 + $0x30] sm:$0xff]
    %v167 = vld [vmem:[#allocation5 + $0x38] sm:$0xff]
    %v168 = vld [vmem:[#allocation5 + $0x40] sm:$0xff]
    %v169 = vld [vmem:[#allocation5 + $0x48] sm:$0xff]
    %v170 = vld [vmem:[#allocation5 + $0x50] sm:$0xff]
    %v171 = vld [vmem:[#allocation5 + $0x58] sm:$0xff]
    %v172 = vld [vmem:[#allocation5 + $0x60] sm:$0xff]
    %v173 = vld [vmem:[#allocation5 + $0x68] sm:$0xff]
    %v174 = vld [vmem:[#allocation5 + $0x70] sm:$0xff]
    %v175 = vld [vmem:[#allocation5 + $0x78] sm:$0xff]
    %v176 = vld [vmem:[%s2] sm:$0x3]
    %v178 = vlaneseq
    %v179 = vshrl.u32 %v178, 7
    %v180 = vsub.s32 0, %v179
    %v181 = vrot.slane %v176, %v180
    %v182 = vlaneseq
    %v183 = vshrl.u32 %v182, 7
    %v184 = vsub.s32 1, %v183
    %v185 = vrot.slane %v176, %v184
    %v204 = vunpack.c.l.b16 %v160
    %v205 = vunpack.c.h.b16 %v160
    %v206 = vunpack.c.l.b16 %v161
    %v207 = vunpack.c.h.b16 %v161
    %v208 = vunpack.c.l.b16 %v162
    %v209 = vunpack.c.h.b16 %v162
    %v210 = vunpack.c.l.b16 %v163
    %v211 = vunpack.c.h.b16 %v163
    %v212 = vunpack.c.l.b16 %v164
    %v213 = vunpack.c.h.b16 %v164
    %v214 = vunpack.c.l.b16 %v165
    %v215 = vunpack.c.h.b16 %v165
    %v216 = vunpack.c.l.b16 %v166
    %v217 = vunpack.c.h.b16 %v166
    %v218 = vunpack.c.l.b16 %v167
    %v219 = vunpack.c.h.b16 %v167
    %v220 = vunpack.c.l.b16 %v168
    %v221 = vunpack.c.h.b16 %v168
    %v222 = vunpack.c.l.b16 %v169
    %v223 = vunpack.c.h.b16 %v169
    %v224 = vunpack.c.l.b16 %v170
    %v225 = vunpack.c.h.b16 %v170
    %v226 = vunpack.c.l.b16 %v171
    %v227 = vunpack.c.h.b16 %v171
    %v228 = vunpack.c.l.b16 %v172
    %v229 = vunpack.c.h.b16 %v172
    %v230 = vunpack.c.l.b16 %v173
    %v231 = vunpack.c.h.b16 %v173
    %v232 = vunpack.c.l.b16 %v174
    %v233 = vunpack.c.h.b16 %v174
    %v234 = vunpack.c.l.b16 %v175
    %v235 = vunpack.c.h.b16 %v175
    %v236 = vpack.c.b16 %v206, %v204
    %v237 = vpack.c.b16 %v207, %v205
    %v238 = vpack.c.b16 %v210, %v208
    %v239 = vpack.c.b16 %v211, %v209
    %v240 = vpack.c.b16 %v214, %v212
    %v241 = vpack.c.b16 %v215, %v213
    %v242 = vpack.c.b16 %v218, %v216
    %v243 = vpack.c.b16 %v219, %v217
    %v244 = vpack.c.b16 %v222, %v220
    %v245 = vpack.c.b16 %v223, %v221
    %v246 = vpack.c.b16 %v226, %v224
    %v247 = vpack.c.b16 %v227, %v225
    %v248 = vpack.c.b16 %v230, %v228
    %v249 = vpack.c.b16 %v231, %v229
    %v250 = vpack.c.b16 %v234, %v232
    %v251 = vpack.c.b16 %v235, %v233
    %268 = vmatprep.subr.bf16.mxu0 %v237
    %269 = vmatpush1.bf16.msra.mxu0 %v236
    %270 = vmatprep.subr.bf16.mxu0 %v239
    %271 = vmatpush1.bf16.msra.mxu0 %v238
    %272 = vmatprep.subr.bf16.mxu0 %v241
    %273 = vmatpush1.bf16.msra.mxu0 %v240
    %274 = vmatprep.subr.bf16.mxu0 %v243
    %275 = vmatpush1.bf16.msra.mxu0 %v242
    %276 = vmatprep.subr.bf16.mxu0 %v245
    %277 = vmatpush1.bf16.msra.mxu0 %v244
    %278 = vmatprep.subr.bf16.mxu0 %v247
    %279 = vmatpush1.bf16.msra.mxu0 %v246
    %280 = vmatprep.subr.bf16.mxu0 %v249
    %281 = vmatpush1.bf16.msra.mxu0 %v248
    %282 = vmatprep.subr.bf16.mxu0 %v251
    %283 = vmatpush1.bf16.msra.mxu0 %v250
    %284 = vmatprep.subr.bf16.mxu0 0
    %285 = vmatpush1.bf16.msra.mxu0 0
    %286 = vmatprep.subr.bf16.mxu0 0
    %287 = vmatpush1.bf16.msra.mxu0 0
    %288 = vmatprep.subr.bf16.mxu0 0
    %289 = vmatpush1.bf16.msra.mxu0 0
    %290 = vmatprep.subr.bf16.mxu0 0
    %291 = vmatpush1.bf16.msra.mxu0 0
    %292 = vmatprep.subr.bf16.mxu0 0
    %293 = vmatpush1.bf16.msra.mxu0 0
    %294 = vmatprep.subr.bf16.mxu0 0
    %295 = vmatpush1.bf16.msra.mxu0 0
    %296 = vmatprep.subr.bf16.mxu0 0
    %297 = vmatpush1.bf16.msra.mxu0 0
    %298 = vmatprep.subr.bf16.mxu0 0
    %299 = vmatpush1.bf16.msra.mxu0 0
    %300 = vmatprep.mubr.bf16.mxu0 0
    %301 = vmatmul.mubr.bf16.gmra.mrb[0].mxu0 %v159
    %v302 = vpop.f32.mrb[0].mxu0
    %v303 = vadd.f32 %v181, %v302
    %v304 = vpop.f32.mrb[0].mxu0
    %v305 = vadd.f32 %v185, %v304
    %v306 = vpop.f32.mrb[0].mxu0
    %v307 = vpop.f32.mrb[0].mxu0
    %308 = vdwg.mxu0
    %vm309 = vcmp.ge.f32.partialorder %v303, 0.0
    %vm310 = vcmp.ge.f32.partialorder %v305, 0.0
    %v311 = vmul.f32 %v303, 0.01
    %v312 = vmul.f32 %v305, 0.01
    %v313 = vsel %vm309, %v303, %v311
    %v314 = vsel %vm310, %v305, %v312
    %v315 = vpack.c.bf16 %v313, %v313
    %v316 = vpack.c.bf16 %v314, %v314
    %v317 = vld [vmem:[#allocation7] sm:$0xf]
    %v318 = vld [vmem:[#allocation7 + $0x4] sm:$0xf]
    %v319 = vld [vmem:[#allocation7 + $0x8] sm:$0xf]
    %v320 = vld [vmem:[#allocation7 + $0xc] sm:$0xf]
    %v321 = vld [vmem:[#allocation7 + $0x10] sm:$0xf]
    %v322 = vld [vmem:[#allocation7 + $0x14] sm:$0xf]
    %v323 = vld [vmem:[#allocation7 + $0x18] sm:$0xf]
    %v324 = vld [vmem:[#allocation7 + $0x1c] sm:$0xf]
    %v325 = vld [vmem:[#allocation7 + $0x20] sm:$0xf]
    %v326 = vld [vmem:[#allocation7 + $0x24] sm:$0xf]
    %v327 = vld [vmem:[#allocation7 + $0x28] sm:$0xf]
    %v328 = vld [vmem:[#allocation7 + $0x2c] sm:$0xf]
    %v329 = vld [vmem:[#allocation7 + $0x30] sm:$0xf]
    %v330 = vld [vmem:[#allocation7 + $0x34] sm:$0xf]
    %v331 = vld [vmem:[#allocation7 + $0x38] sm:$0xf]
    %v332 = vld [vmem:[#allocation7 + $0x3c] sm:$0xf]
    %v333 = vld [vmem:[#allocation7 + $0x40] sm:$0xf]
    %v334 = vld [vmem:[#allocation7 + $0x44] sm:$0xf]
    %v335 = vld [vmem:[#allocation7 + $0x48] sm:$0xf]
    %v336 = vld [vmem:[#allocation7 + $0x4c] sm:$0xf]
    %v337 = vld [vmem:[#allocation7 + $0x50] sm:$0xf]
    %v338 = vld [vmem:[#allocation7 + $0x54] sm:$0xf]
    %v339 = vld [vmem:[#allocation7 + $0x58] sm:$0xf]
    %v340 = vld [vmem:[#allocation7 + $0x5c] sm:$0xf]
    %v341 = vld [vmem:[#allocation7 + $0x60] sm:$0xf]
    %v342 = vld [vmem:[#allocation7 + $0x64] sm:$0xf]
    %v343 = vld [vmem:[#allocation7 + $0x68] sm:$0xf]
    %v344 = vld [vmem:[#allocation7 + $0x6c] sm:$0xf]
    %v345 = vld [vmem:[#allocation7 + $0x70] sm:$0xf]
    %v346 = vld [vmem:[#allocation7 + $0x74] sm:$0xf]
    %v347 = vld [vmem:[#allocation7 + $0x78] sm:$0xf]
    %v348 = vld [vmem:[#allocation7 + $0x7c] sm:$0xf]
    %v349 = vld [vmem:[%s4] sm:$0x1]
    %v351 = vlaneseq
    %v352 = vshrl.u32 %v351, 7
    %v353 = vsub.s32 0, %v352
    %v354 = vrot.slane %v349, %v353
    %v388 = vunpack.c.l.b16 %v317
    %v389 = vunpack.c.l.b16 %v318
    %v390 = vunpack.c.l.b16 %v319
    %v391 = vunpack.c.l.b16 %v320
    %v392 = vunpack.c.l.b16 %v321
    %v393 = vunpack.c.l.b16 %v322
    %v394 = vunpack.c.l.b16 %v323
    %v395 = vunpack.c.l.b16 %v324
    %v396 = vunpack.c.l.b16 %v325
    %v397 = vunpack.c.l.b16 %v326
    %v398 = vunpack.c.l.b16 %v327
    %v399 = vunpack.c.l.b16 %v328
    %v400 = vunpack.c.l.b16 %v329
    %v401 = vunpack.c.l.b16 %v330
    %v402 = vunpack.c.l.b16 %v331
    %v403 = vunpack.c.l.b16 %v332
    %v404 = vunpack.c.l.b16 %v333
    %v405 = vunpack.c.l.b16 %v334
    %v406 = vunpack.c.l.b16 %v335
    %v407 = vunpack.c.l.b16 %v336
    %v408 = vunpack.c.l.b16 %v337
    %v409 = vunpack.c.l.b16 %v338
    %v410 = vunpack.c.l.b16 %v339
    %v411 = vunpack.c.l.b16 %v340
    %v412 = vunpack.c.l.b16 %v341
    %v413 = vunpack.c.l.b16 %v342
    %v414 = vunpack.c.l.b16 %v343
    %v415 = vunpack.c.l.b16 %v344
    %v416 = vunpack.c.l.b16 %v345
    %v417 = vunpack.c.l.b16 %v346
    %v418 = vunpack.c.l.b16 %v347
    %v419 = vunpack.c.l.b16 %v348
    %v420 = vpack.c.b16 %v389, %v388
    %v421 = vpack.c.b16 %v391, %v390
    %v422 = vpack.c.b16 %v393, %v392
    %v423 = vpack.c.b16 %v395, %v394
    %v424 = vpack.c.b16 %v397, %v396
    %v425 = vpack.c.b16 %v399, %v398
    %v426 = vpack.c.b16 %v401, %v400
    %v427 = vpack.c.b16 %v403, %v402
    %v428 = vpack.c.b16 %v405, %v404
    %v429 = vpack.c.b16 %v407, %v406
    %v430 = vpack.c.b16 %v409, %v408
    %v431 = vpack.c.b16 %v411, %v410
    %v432 = vpack.c.b16 %v413, %v412
    %v433 = vpack.c.b16 %v415, %v414
    %v434 = vpack.c.b16 %v417, %v416
    %v435 = vpack.c.b16 %v419, %v418
    %452 = vmatprep.subr.bf16.mxu0 0
    %453 = vmatpush1.bf16.msra.mxu0 %v420
    %454 = vmatprep.subr.bf16.mxu0 0
    %455 = vmatpush1.bf16.msra.mxu0 %v421
    %456 = vmatprep.subr.bf16.mxu0 0
    %457 = vmatpush1.bf16.msra.mxu0 %v422
    %458 = vmatprep.subr.bf16.mxu0 0
    %459 = vmatpush1.bf16.msra.mxu0 %v423
    %460 = vmatprep.subr.bf16.mxu0 0
    %461 = vmatpush1.bf16.msra.mxu0 %v424
    %462 = vmatprep.subr.bf16.mxu0 0
    %463 = vmatpush1.bf16.msra.mxu0 %v425
    %464 = vmatprep.subr.bf16.mxu0 0
    %465 = vmatpush1.bf16.msra.mxu0 %v426
    %466 = vmatprep.subr.bf16.mxu0 0
    %467 = vmatpush1.bf16.msra.mxu0 %v427
    %468 = vmatprep.subr.bf16.mxu0 0
    %469 = vmatpush1.bf16.msra.mxu0 %v428
    %470 = vmatprep.subr.bf16.mxu0 0
    %471 = vmatpush1.bf16.msra.mxu0 %v429
    %472 = vmatprep.subr.bf16.mxu0 0
    %473 = vmatpush1.bf16.msra.mxu0 %v430
    %474 = vmatprep.subr.bf16.mxu0 0
    %475 = vmatpush1.bf16.msra.mxu0 %v431
    %476 = vmatprep.subr.bf16.mxu0 0
    %477 = vmatpush1.bf16.msra.mxu0 %v432
    %478 = vmatprep.subr.bf16.mxu0 0
    %479 = vmatpush1.bf16.msra.mxu0 %v433
    %480 = vmatprep.subr.bf16.mxu0 0
    %481 = vmatpush1.bf16.msra.mxu0 %v434
    %482 = vmatprep.subr.bf16.mxu0 0
    %483 = vmatpush1.bf16.msra.mxu0 %v435
    %484 = vmatprep.mubr.bf16.mxu0 %v316
    %485 = vmatmul.mubr.bf16.gmra.mrb[0].mxu0 %v315
    %v486 = vpop.f32.mrb[0].mxu0
    %v487 = vadd.f32 %v354, %v486
    %v488 = vpop.f32.mrb[0].mxu0
    %v489 = vpop.f32.mrb[0].mxu0
    %v490 = vpop.f32.mrb[0].mxu0
    %491 = vdwg.mxu0
    %vm492 = vcmp.ge.f32.partialorder %v487, 0.0
    %v493 = vmul.f32 %v487, 0.01
    %v494 = vsel %vm492, %v487, %v493
    %v495 = vpack.c.bf16 %v494, %v494
    %v496 = vld [vmem:[#allocation8] sm:$0xf]
    %v497 = vld [vmem:[#allocation8 + $0x4] sm:$0xf]
    %v498 = vld [vmem:[#allocation8 + $0x8] sm:$0xf]
    %v499 = vld [vmem:[#allocation8 + $0xc] sm:$0xf]
    %v500 = vld [vmem:[#allocation8 + $0x10] sm:$0xf]
    %v501 = vld [vmem:[#allocation8 + $0x14] sm:$0xf]
    %v502 = vld [vmem:[#allocation8 + $0x18] sm:$0xf]
    %v503 = vld [vmem:[#allocation8 + $0x1c] sm:$0xf]
    %v504 = vld [vmem:[#allocation8 + $0x20] sm:$0xf]
    %v505 = vld [vmem:[#allocation8 + $0x24] sm:$0xf]
    %v506 = vld [vmem:[#allocation8 + $0x28] sm:$0xf]
    %v507 = vld [vmem:[#allocation8 + $0x2c] sm:$0xf]
    %v508 = vld [vmem:[#allocation8 + $0x30] sm:$0xf]
    %v509 = vld [vmem:[#allocation8 + $0x34] sm:$0xf]
    %v510 = vld [vmem:[#allocation8 + $0x38] sm:$0xf]
    %v511 = vld [vmem:[#allocation8 + $0x3c] sm:$0xf]
    %v512 = vld [vmem:[%s6] sm:$0x1]
    %v514 = vlaneseq
    %v515 = vshrl.u32 %v514, 7
    %v516 = vsub.s32 0, %v515
    %v517 = vrot.slane %v512, %v516
    %v535 = vunpack.c.l.b16 %v496
    %v536 = vunpack.c.l.b16 %v497
    %v537 = vunpack.c.l.b16 %v498
    %v538 = vunpack.c.l.b16 %v499
    %v539 = vunpack.c.l.b16 %v500
    %v540 = vunpack.c.l.b16 %v501
    %v541 = vunpack.c.l.b16 %v502
    %v542 = vunpack.c.l.b16 %v503
    %v543 = vunpack.c.l.b16 %v504
    %v544 = vunpack.c.l.b16 %v505
    %v545 = vunpack.c.l.b16 %v506
    %v546 = vunpack.c.l.b16 %v507
    %v547 = vunpack.c.l.b16 %v508
    %v548 = vunpack.c.l.b16 %v509
    %v549 = vunpack.c.l.b16 %v510
    %v550 = vunpack.c.l.b16 %v511
    %v551 = vpack.c.b16 %v536, %v535
    %v552 = vpack.c.b16 %v538, %v537
    %v553 = vpack.c.b16 %v540, %v539
    %v554 = vpack.c.b16 %v542, %v541
    %v555 = vpack.c.b16 %v544, %v543
    %v556 = vpack.c.b16 %v546, %v545
    %v557 = vpack.c.b16 %v548, %v547
    %v558 = vpack.c.b16 %v550, %v549
    %567 = vmatprep.subr.bf16.mxu0 0
    %568 = vmatpush1.bf16.msra.mxu0 %v551
    %569 = vmatprep.subr.bf16.mxu0 0
    %570 = vmatpush1.bf16.msra.mxu0 %v552
    %571 = vmatprep.subr.bf16.mxu0 0
    %572 = vmatpush1.bf16.msra.mxu0 %v553
    %573 = vmatprep.subr.bf16.mxu0 0
    %574 = vmatpush1.bf16.msra.mxu0 %v554
    %575 = vmatprep.subr.bf16.mxu0 0
    %576 = vmatpush1.bf16.msra.mxu0 %v555
    %577 = vmatprep.subr.bf16.mxu0 0
    %578 = vmatpush1.bf16.msra.mxu0 %v556
    %579 = vmatprep.subr.bf16.mxu0 0
    %580 = vmatpush1.bf16.msra.mxu0 %v557
    %581 = vmatprep.subr.bf16.mxu0 0
    %582 = vmatpush1.bf16.msra.mxu0 %v558
    %583 = vmatprep.subr.bf16.mxu0 0
    %584 = vmatpush1.bf16.msra.mxu0 0
    %585 = vmatprep.subr.bf16.mxu0 0
    %586 = vmatpush1.bf16.msra.mxu0 0
    %587 = vmatprep.subr.bf16.mxu0 0
    %588 = vmatpush1.bf16.msra.mxu0 0
    %589 = vmatprep.subr.bf16.mxu0 0
    %590 = vmatpush1.bf16.msra.mxu0 0
    %591 = vmatprep.subr.bf16.mxu0 0
    %592 = vmatpush1.bf16.msra.mxu0 0
    %593 = vmatprep.subr.bf16.mxu0 0
    %594 = vmatpush1.bf16.msra.mxu0 0
    %595 = vmatprep.subr.bf16.mxu0 0
    %596 = vmatpush1.bf16.msra.mxu0 0
    %597 = vmatprep.subr.bf16.mxu0 0
    %598 = vmatpush1.bf16.msra.mxu0 0
    %599 = vmatprep.mubr.bf16.mxu0 0
    %600 = vmatmul.mubr.bf16.gmra.mrb[0].mxu0 %v495
    %v601 = vpop.f32.mrb[0].mxu0
    %v602 = vadd.f32 %v517, %v601
    %v603 = vpop.f32.mrb[0].mxu0
    %v604 = vpop.f32.mrb[0].mxu0
    %v605 = vpop.f32.mrb[0].mxu0
    %606 = vdwg.mxu0
    %vm607 = vcmp.ge.f32.partialorder %v602, 0.0
    %v608 = vmul.f32 %v602, 0.01
    %v609 = vsel %vm607, %v602, %v608
    %v610 = vpack.c.bf16 %v609, %v609
    %v611 = vld [vmem:[#allocation10] sm:$0xf]
    %v612 = vld [vmem:[#allocation10 + $0x4] sm:$0xf]
    %v613 = vld [vmem:[#allocation10 + $0x8] sm:$0xf]
    %v614 = vld [vmem:[#allocation10 + $0xc] sm:$0xf]
    %v615 = vld [vmem:[#allocation10 + $0x10] sm:$0xf]
    %v616 = vld [vmem:[#allocation10 + $0x14] sm:$0xf]
    %v617 = vld [vmem:[#allocation10 + $0x18] sm:$0xf]
    %v618 = vld [vmem:[#allocation10 + $0x1c] sm:$0xf]
    %v619 = vld [vmem:[#allocation10 + $0x20] sm:$0xf]
    %v620 = vld [vmem:[#allocation10 + $0x24] sm:$0xf]
    %v621 = vld [vmem:[#allocation10 + $0x28] sm:$0xf]
    %v622 = vld [vmem:[#allocation10 + $0x2c] sm:$0xf]
    %v623 = vld [vmem:[#allocation10 + $0x30] sm:$0xf]
    %v624 = vld [vmem:[#allocation10 + $0x34] sm:$0xf]
    %v625 = vld [vmem:[#allocation10 + $0x38] sm:$0xf]
    %v626 = vld [vmem:[#allocation10 + $0x3c] sm:$0xf]
    %v627 = vld [vmem:[%s8] sm:$0x1]
    %v629 = vlaneseq
    %v630 = vshrl.u32 %v629, 7
    %v631 = vsub.s32 0, %v630
    %v632 = vrot.slane %v627, %v631
    %v650 = vunpack.c.l.b16 %v611
    %v651 = vunpack.c.l.b16 %v612
    %v652 = vunpack.c.l.b16 %v613
    %v653 = vunpack.c.l.b16 %v614
    %v654 = vunpack.c.l.b16 %v615
    %v655 = vunpack.c.l.b16 %v616
    %v656 = vunpack.c.l.b16 %v617
    %v657 = vunpack.c.l.b16 %v618
    %v658 = vunpack.c.l.b16 %v619
    %v659 = vunpack.c.l.b16 %v620
    %v660 = vunpack.c.l.b16 %v621
    %v661 = vunpack.c.l.b16 %v622
    %v662 = vunpack.c.l.b16 %v623
    %v663 = vunpack.c.l.b16 %v624
    %v664 = vunpack.c.l.b16 %v625
    %v665 = vunpack.c.l.b16 %v626
    %v666 = vpack.c.b16 %v651, %v650
    %v667 = vpack.c.b16 %v653, %v652
    %v668 = vpack.c.b16 %v655, %v654
    %v669 = vpack.c.b16 %v657, %v656
    %v670 = vpack.c.b16 %v659, %v658
    %v671 = vpack.c.b16 %v661, %v660
    %v672 = vpack.c.b16 %v663, %v662
    %v673 = vpack.c.b16 %v665, %v664
    %682 = vmatprep.subr.bf16.mxu0 0
    %683 = vmatpush1.bf16.msra.mxu0 %v666
    %684 = vmatprep.subr.bf16.mxu0 0
    %685 = vmatpush1.bf16.msra.mxu0 %v667
    %686 = vmatprep.subr.bf16.mxu0 0
    %687 = vmatpush1.bf16.msra.mxu0 %v668
    %688 = vmatprep.subr.bf16.mxu0 0
    %689 = vmatpush1.bf16.msra.mxu0 %v669
    %690 = vmatprep.subr.bf16.mxu0 0
    %691 = vmatpush1.bf16.msra.mxu0 %v670
    %692 = vmatprep.subr.bf16.mxu0 0
    %693 = vmatpush1.bf16.msra.mxu0 %v671
    %694 = vmatprep.subr.bf16.mxu0 0
    %695 = vmatpush1.bf16.msra.mxu0 %v672
    %696 = vmatprep.subr.bf16.mxu0 0
    %697 = vmatpush1.bf16.msra.mxu0 %v673
    %698 = vmatprep.subr.bf16.mxu0 0
    %699 = vmatpush1.bf16.msra.mxu0 0
    %700 = vmatprep.subr.bf16.mxu0 0
    %701 = vmatpush1.bf16.msra.mxu0 0
    %702 = vmatprep.subr.bf16.mxu0 0
    %703 = vmatpush1.bf16.msra.mxu0 0
    %704 = vmatprep.subr.bf16.mxu0 0
    %705 = vmatpush1.bf16.msra.mxu0 0
    %706 = vmatprep.subr.bf16.mxu0 0
    %707 = vmatpush1.bf16.msra.mxu0 0
    %708 = vmatprep.subr.bf16.mxu0 0
    %709 = vmatpush1.bf16.msra.mxu0 0
    %710 = vmatprep.subr.bf16.mxu0 0
    %711 = vmatpush1.bf16.msra.mxu0 0
    %712 = vmatprep.subr.bf16.mxu0 0
    %713 = vmatpush1.bf16.msra.mxu0 0
    %714 = vmatprep.mubr.bf16.mxu0 0
    %715 = vmatmul.mubr.bf16.gmra.mrb[0].mxu0 %v610
    %v716 = vpop.f32.mrb[0].mxu0
    %v717 = vadd.f32 %v632, %v716
    %v718 = vpop.f32.mrb[0].mxu0
    %v719 = vpop.f32.mrb[0].mxu0
    %v720 = vpop.f32.mrb[0].mxu0
    %721 = vdwg.mxu0
    %vm722 = vcmp.ge.f32.partialorder %v717, 0.0
    %v723 = vmul.f32 %v717, 0.01
    %v724 = vsel %vm722, %v717, %v723
    %v725 = vpack.c.bf16 %v724, %v724
    %v726 = vld [vmem:[#allocation11] sm:$0xf]
    %v727 = vld [vmem:[#allocation11 + $0x4] sm:$0xf]
    %v728 = vld [vmem:[#allocation11 + $0x8] sm:$0xf]
    %v729 = vld [vmem:[#allocation11 + $0xc] sm:$0xf]
    %v730 = vld [vmem:[#allocation11 + $0x10] sm:$0xf]
    %v731 = vld [vmem:[#allocation11 + $0x14] sm:$0xf]
    %v732 = vld [vmem:[#allocation11 + $0x18] sm:$0xf]
    %v733 = vld [vmem:[#allocation11 + $0x1c] sm:$0xf]
    %v734 = vld [vmem:[#allocation11 + $0x20] sm:$0xf]
    %v735 = vld [vmem:[#allocation11 + $0x24] sm:$0xf]
    %v736 = vld [vmem:[#allocation11 + $0x28] sm:$0xf]
    %v737 = vld [vmem:[#allocation11 + $0x2c] sm:$0xf]
    %v738 = vld [vmem:[#allocation11 + $0x30] sm:$0xf]
    %v739 = vld [vmem:[#allocation11 + $0x34] sm:$0xf]
    %v740 = vld [vmem:[#allocation11 + $0x38] sm:$0xf]
    %v741 = vld [vmem:[#allocation11 + $0x3c] sm:$0xf]
    %v742 = vld [vmem:[%s10] sm:$0x1]
    %v744 = vlaneseq
    %v745 = vshrl.u32 %v744, 7
    %v746 = vsub.s32 0, %v745
    %v747 = vrot.slane %v742, %v746
    %v765 = vunpack.c.l.b16 %v726
    %v766 = vunpack.c.l.b16 %v727
    %v767 = vunpack.c.l.b16 %v728
    %v768 = vunpack.c.l.b16 %v729
    %v769 = vunpack.c.l.b16 %v730
    %v770 = vunpack.c.l.b16 %v731
    %v771 = vunpack.c.l.b16 %v732
    %v772 = vunpack.c.l.b16 %v733
    %v773 = vunpack.c.l.b16 %v734
    %v774 = vunpack.c.l.b16 %v735
    %v775 = vunpack.c.l.b16 %v736
    %v776 = vunpack.c.l.b16 %v737
    %v777 = vunpack.c.l.b16 %v738
    %v778 = vunpack.c.l.b16 %v739
    %v779 = vunpack.c.l.b16 %v740
    %v780 = vunpack.c.l.b16 %v741
    %v781 = vpack.c.b16 %v766, %v765
    %v782 = vpack.c.b16 %v768, %v767
    %v783 = vpack.c.b16 %v770, %v769
    %v784 = vpack.c.b16 %v772, %v771
    %v785 = vpack.c.b16 %v774, %v773
    %v786 = vpack.c.b16 %v776, %v775
    %v787 = vpack.c.b16 %v778, %v777
    %v788 = vpack.c.b16 %v780, %v779
    %797 = vmatprep.subr.bf16.mxu0 0
    %798 = vmatpush1.bf16.msra.mxu0 %v781
    %799 = vmatprep.subr.bf16.mxu0 0
    %800 = vmatpush1.bf16.msra.mxu0 %v782
    %801 = vmatprep.subr.bf16.mxu0 0
    %802 = vmatpush1.bf16.msra.mxu0 %v783
    %803 = vmatprep.subr.bf16.mxu0 0
    %804 = vmatpush1.bf16.msra.mxu0 %v784
    %805 = vmatprep.subr.bf16.mxu0 0
    %806 = vmatpush1.bf16.msra.mxu0 %v785
    %807 = vmatprep.subr.bf16.mxu0 0
    %808 = vmatpush1.bf16.msra.mxu0 %v786
    %809 = vmatprep.subr.bf16.mxu0 0
    %810 = vmatpush1.bf16.msra.mxu0 %v787
    %811 = vmatprep.subr.bf16.mxu0 0
    %812 = vmatpush1.bf16.msra.mxu0 %v788
    %813 = vmatprep.subr.bf16.mxu0 0
    %814 = vmatpush1.bf16.msra.mxu0 0
    %815 = vmatprep.subr.bf16.mxu0 0
    %816 = vmatpush1.bf16.msra.mxu0 0
    %817 = vmatprep.subr.bf16.mxu0 0
    %818 = vmatpush1.bf16.msra.mxu0 0
    %819 = vmatprep.subr.bf16.mxu0 0
    %820 = vmatpush1.bf16.msra.mxu0 0
    %821 = vmatprep.subr.bf16.mxu0 0
    %822 = vmatpush1.bf16.msra.mxu0 0
    %823 = vmatprep.subr.bf16.mxu0 0
    %824 = vmatpush1.bf16.msra.mxu0 0
    %825 = vmatprep.subr.bf16.mxu0 0
    %826 = vmatpush1.bf16.msra.mxu0 0
    %827 = vmatprep.subr.bf16.mxu0 0
    %828 = vmatpush1.bf16.msra.mxu0 0
    %829 = vmatprep.mubr.bf16.mxu0 0
    %830 = vmatmul.mubr.bf16.gmra.mrb[0].mxu0 %v725
    %v831 = vpop.f32.mrb[0].mxu0
    %v832 = vadd.f32 %v747, %v831
    %v833 = vpop.f32.mrb[0].mxu0
    %v834 = vpop.f32.mrb[0].mxu0
    %v835 = vpop.f32.mrb[0].mxu0
    %836 = vdwg.mxu0
    %vm837 = vcmp.ge.f32.partialorder %v832, 0.0
    %v838 = vmul.f32 %v832, 0.01
    %v839 = vsel %vm837, %v832, %v838
    %v840 = vpack.c.bf16 %v839, %v839
    %v841 = vld [vmem:[#allocation13] sm:$0xf]
    %v842 = vld [vmem:[#allocation13 + $0x4] sm:$0xf]
    %v843 = vld [vmem:[#allocation13 + $0x8] sm:$0xf]
    %v844 = vld [vmem:[#allocation13 + $0xc] sm:$0xf]
    %v845 = vld [vmem:[#allocation13 + $0x10] sm:$0xf]
    %v846 = vld [vmem:[#allocation13 + $0x14] sm:$0xf]
    %v847 = vld [vmem:[#allocation13 + $0x18] sm:$0xf]
    %v848 = vld [vmem:[#allocation13 + $0x1c] sm:$0xf]
    %v849 = vld [vmem:[#allocation13 + $0x20] sm:$0xf]
    %v850 = vld [vmem:[#allocation13 + $0x24] sm:$0xf]
    %v851 = vld [vmem:[#allocation13 + $0x28] sm:$0xf]
    %v852 = vld [vmem:[#allocation13 + $0x2c] sm:$0xf]
    %v853 = vld [vmem:[#allocation13 + $0x30] sm:$0xf]
    %v854 = vld [vmem:[#allocation13 + $0x34] sm:$0xf]
    %v855 = vld [vmem:[#allocation13 + $0x38] sm:$0xf]
    %v856 = vld [vmem:[#allocation13 + $0x3c] sm:$0xf]
    %v857 = vld [vmem:[%s12] sm:$0x1]
    %v859 = vlaneseq
    %v860 = vshrl.u32 %v859, 7
    %v861 = vsub.s32 0, %v860
    %v862 = vrot.slane %v857, %v861
    %v880 = vunpack.c.l.b16 %v841
    %v881 = vunpack.c.l.b16 %v842
    %v882 = vunpack.c.l.b16 %v843
    %v883 = vunpack.c.l.b16 %v844
    %v884 = vunpack.c.l.b16 %v845
    %v885 = vunpack.c.l.b16 %v846
    %v886 = vunpack.c.l.b16 %v847
    %v887 = vunpack.c.l.b16 %v848
    %v888 = vunpack.c.l.b16 %v849
    %v889 = vunpack.c.l.b16 %v850
    %v890 = vunpack.c.l.b16 %v851
    %v891 = vunpack.c.l.b16 %v852
    %v892 = vunpack.c.l.b16 %v853
    %v893 = vunpack.c.l.b16 %v854
    %v894 = vunpack.c.l.b16 %v855
    %v895 = vunpack.c.l.b16 %v856
    %v896 = vpack.c.b16 %v881, %v880
    %v897 = vpack.c.b16 %v883, %v882
    %v898 = vpack.c.b16 %v885, %v884
    %v899 = vpack.c.b16 %v887, %v886
    %v900 = vpack.c.b16 %v889, %v888
    %v901 = vpack.c.b16 %v891, %v890
    %v902 = vpack.c.b16 %v893, %v892
    %v903 = vpack.c.b16 %v895, %v894
    %912 = vmatprep.subr.bf16.mxu0 0
    %913 = vmatpush1.bf16.msra.mxu0 %v896
    %914 = vmatprep.subr.bf16.mxu0 0
    %915 = vmatpush1.bf16.msra.mxu0 %v897
    %916 = vmatprep.subr.bf16.mxu0 0
    %917 = vmatpush1.bf16.msra.mxu0 %v898
    %918 = vmatprep.subr.bf16.mxu0 0
    %919 = vmatpush1.bf16.msra.mxu0 %v899
    %920 = vmatprep.subr.bf16.mxu0 0
    %921 = vmatpush1.bf16.msra.mxu0 %v900
    %922 = vmatprep.subr.bf16.mxu0 0
    %923 = vmatpush1.bf16.msra.mxu0 %v901
    %924 = vmatprep.subr.bf16.mxu0 0
    %925 = vmatpush1.bf16.msra.mxu0 %v902
    %926 = vmatprep.subr.bf16.mxu0 0
    %927 = vmatpush1.bf16.msra.mxu0 %v903
    %928 = vmatprep.subr.bf16.mxu0 0
    %929 = vmatpush1.bf16.msra.mxu0 0
    %930 = vmatprep.subr.bf16.mxu0 0
    %931 = vmatpush1.bf16.msra.mxu0 0
    %932 = vmatprep.subr.bf16.mxu0 0
    %933 = vmatpush1.bf16.msra.mxu0 0
    %934 = vmatprep.subr.bf16.mxu0 0
    %935 = vmatpush1.bf16.msra.mxu0 0
    %936 = vmatprep.subr.bf16.mxu0 0
    %937 = vmatpush1.bf16.msra.mxu0 0
    %938 = vmatprep.subr.bf16.mxu0 0
    %939 = vmatpush1.bf16.msra.mxu0 0
    %940 = vmatprep.subr.bf16.mxu0 0
    %941 = vmatpush1.bf16.msra.mxu0 0
    %942 = vmatprep.subr.bf16.mxu0 0
    %943 = vmatpush1.bf16.msra.mxu0 0
    %944 = vmatprep.mubr.bf16.mxu0 0
    %945 = vmatmul.mubr.bf16.gmra.mrb[0].mxu0 %v840
    %v946 = vpop.f32.mrb[0].mxu0
    %v947 = vadd.f32 %v862, %v946
    %v948 = vpop.f32.mrb[0].mxu0
    %v949 = vpop.f32.mrb[0].mxu0
    %v950 = vpop.f32.mrb[0].mxu0
    %951 = vdwg.mxu0
    %vm952 = vcmp.ge.f32.partialorder %v947, 0.0
    %v953 = vmul.f32 %v947, 0.01
    %v954 = vsel %vm952, %v947, %v953
    %v955 = vpack.c.bf16 %v954, %v954
    %v956 = vld [vmem:[#allocation14] sm:$0xf]
    %v957 = vld [vmem:[#allocation14 + $0x4] sm:$0xf]
    %v958 = vld [vmem:[#allocation14 + $0x8] sm:$0xf]
    %v959 = vld [vmem:[#allocation14 + $0xc] sm:$0xf]
    %v960 = vld [vmem:[#allocation14 + $0x10] sm:$0xf]
    %v961 = vld [vmem:[#allocation14 + $0x14] sm:$0xf]
    %v962 = vld [vmem:[#allocation14 + $0x18] sm:$0xf]
    %v963 = vld [vmem:[#allocation14 + $0x1c] sm:$0xf]
    %v964 = vld [vmem:[#allocation14 + $0x20] sm:$0xf]
    %v965 = vld [vmem:[#allocation14 + $0x24] sm:$0xf]
    %v966 = vld [vmem:[#allocation14 + $0x28] sm:$0xf]
    %v967 = vld [vmem:[#allocation14 + $0x2c] sm:$0xf]
    %v968 = vld [vmem:[#allocation14 + $0x30] sm:$0xf]
    %v969 = vld [vmem:[#allocation14 + $0x34] sm:$0xf]
    %v970 = vld [vmem:[#allocation14 + $0x38] sm:$0xf]
    %v971 = vld [vmem:[#allocation14 + $0x3c] sm:$0xf]
    %v972 = vld [vmem:[%s14] sm:$0x1]
    %v974 = vlaneseq
    %v975 = vshrl.u32 %v974, 7
    %v976 = vsub.s32 0, %v975
    %v977 = vrot.slane %v972, %v976
    %v995 = vunpack.c.l.b16 %v956
    %v996 = vunpack.c.l.b16 %v957
    %v997 = vunpack.c.l.b16 %v958
    %v998 = vunpack.c.l.b16 %v959
    %v999 = vunpack.c.l.b16 %v960
    %v1000 = vunpack.c.l.b16 %v961
    %v1001 = vunpack.c.l.b16 %v962
    %v1002 = vunpack.c.l.b16 %v963
    %v1003 = vunpack.c.l.b16 %v964
    %v1004 = vunpack.c.l.b16 %v965
    %v1005 = vunpack.c.l.b16 %v966
    %v1006 = vunpack.c.l.b16 %v967
    %v1007 = vunpack.c.l.b16 %v968
    %v1008 = vunpack.c.l.b16 %v969
    %v1009 = vunpack.c.l.b16 %v970
    %v1010 = vunpack.c.l.b16 %v971
    %v1011 = vpack.c.b16 %v996, %v995
    %v1012 = vpack.c.b16 %v998, %v997
    %v1013 = vpack.c.b16 %v1000, %v999
    %v1014 = vpack.c.b16 %v1002, %v1001
    %v1015 = vpack.c.b16 %v1004, %v1003
    %v1016 = vpack.c.b16 %v1006, %v1005
    %v1017 = vpack.c.b16 %v1008, %v1007
    %v1018 = vpack.c.b16 %v1010, %v1009
    %1027 = vmatprep.subr.bf16.mxu0 0
    %1028 = vmatpush1.bf16.msra.mxu0 %v1011
    %1029 = vmatprep.subr.bf16.mxu0 0
    %1030 = vmatpush1.bf16.msra.mxu0 %v1012
    %1031 = vmatprep.subr.bf16.mxu0 0
    %1032 = vmatpush1.bf16.msra.mxu0 %v1013
    %1033 = vmatprep.subr.bf16.mxu0 0
    %1034 = vmatpush1.bf16.msra.mxu0 %v1014
    %1035 = vmatprep.subr.bf16.mxu0 0
    %1036 = vmatpush1.bf16.msra.mxu0 %v1015
    %1037 = vmatprep.subr.bf16.mxu0 0
    %1038 = vmatpush1.bf16.msra.mxu0 %v1016
    %1039 = vmatprep.subr.bf16.mxu0 0
    %1040 = vmatpush1.bf16.msra.mxu0 %v1017
    %1041 = vmatprep.subr.bf16.mxu0 0
    %1042 = vmatpush1.bf16.msra.mxu0 %v1018
    %1043 = vmatprep.subr.bf16.mxu0 0
    %1044 = vmatpush1.bf16.msra.mxu0 0
    %1045 = vmatprep.subr.bf16.mxu0 0
    %1046 = vmatpush1.bf16.msra.mxu0 0
    %1047 = vmatprep.subr.bf16.mxu0 0
    %1048 = vmatpush1.bf16.msra.mxu0 0
    %1049 = vmatprep.subr.bf16.mxu0 0
    %1050 = vmatpush1.bf16.msra.mxu0 0
    %1051 = vmatprep.subr.bf16.mxu0 0
    %1052 = vmatpush1.bf16.msra.mxu0 0
    %1053 = vmatprep.subr.bf16.mxu0 0
    %1054 = vmatpush1.bf16.msra.mxu0 0
    %1055 = vmatprep.subr.bf16.mxu0 0
    %1056 = vmatpush1.bf16.msra.mxu0 0
    %1057 = vmatprep.subr.bf16.mxu0 0
    %1058 = vmatpush1.bf16.msra.mxu0 0
    %1059 = vmatprep.mubr.bf16.mxu0 0
    %1060 = vmatmul.mubr.bf16.gmra.mrb[0].mxu0 %v955
    %v1061 = vpop.f32.mrb[0].mxu0
    %v1062 = vadd.f32 %v977, %v1061
    %v1063 = vpop.f32.mrb[0].mxu0
    %v1064 = vpop.f32.mrb[0].mxu0
    %v1065 = vpop.f32.mrb[0].mxu0
    %1066 = vdwg.mxu0
    %1067 = vst [vmem:[#allocation16] sm:$0xff] %v1062
    // Predicated region
    $region94: #{tpu_custom_call.1} parent=1 // pred_check
      _
    $region95: #{tpu_custom_call.1} parent=1 // pred_check_branch
      %1069 = sbr.rel (0) target = $region97
    $region96: #{tpu_custom_call.1} parent=1 // pred_region
      %s1071 = ssub.s32 128, 128
      %1072 = vsyncadd [#allocation4], %s1071
      %s1074 = sshll.u32 [#allocation16], 4
      %s1075 = int_to_ptr.vmem [resolvable:$true] %s1074
      %1077 = dma.vmem_to_hbm [thread:$0]  %s1075, 128, %s15, [#allocation4]
    $region97: #{tpu_custom_call.1} parent=1 // pred_fallthru
      _
    // Predicated region
    $region98: #{tpu_custom_call.1} parent=1 // pred_check
      _
    $region99: #{tpu_custom_call.1} parent=1 // pred_check_branch
      %1079 = sbr.rel (0) target = $region101
    $region100: #{tpu_custom_call.1} parent=1 // pred_region
      %1080 = dma.done [#allocation4], 128
    $region101: #{tpu_custom_call.1} parent=1 // pred_fallthru
      _
    %1081 = vsyncpa [#allocation3], 1
    %1082 = vsyncpa [#allocation6], 1
    %1083 = vsyncpa [#allocation9], 1
    %1084 = vsyncpa [#allocation12], 1
    %1085 = vsyncpa [#allocation15], 1
    %1086 = vsyncpa [#allocation4], 1

</llo_original>
